<compile_context>
chip_gen: v5e
topology: v5e:2x2
jax: 0.10.0
libtpu: 0.0.40
codegen_flags: <defaults>
</compile_context>

<pallas_src>
import math
from functools import partial

import jax
import jax.numpy as jnp
import numpy as np
from jax.experimental import pallas as pl
from jax.experimental.pallas import tpu as pltpu


# ----------------------------------------------------------------------------- kernel
def _dwconv_kernel(x_ref, w_ref, b_ref, o_ref, *, H, W):
    """One (1, CT, H*W) block: depthwise 3x3 conv, zero padding=1, plus bias."""
    L = H * W
    P = W + 1                                   # flat zero pad on each side of the slab

    x = x_ref[0]                                # (CT, L) float32
    w = w_ref[...]                              # (CT, 9) taps, k = (dh+1)*3 + (dw+1)
    b = b_ref[...]                              # (CT, 1)
    ct = x.shape[0]

    # Zero-padded flat slab: xpad[:, j] == x[:, j - P] for j in [P, P+L), zeros elsewhere.
    # Every tap below is a *static* lane slice of this single slab -- no per-tap
    # concat-with-zeros materializations.
    zpad = jnp.zeros((ct, P), jnp.float32)
    xpad = jnp.concatenate([zpad, x, zpad], axis=1)        # (CT, L + 2W + 2)

    # Column-boundary masks (row boundaries are already covered by the zero pad).
    ww = jax.lax.broadcasted_iota(jnp.int32, (1, L), 1) % W
    w_ok = {-1: ww >= 1, 0: None, 1: ww <= W - 2}

    # Center tap + bias initialize the accumulator (no shift, no mask, no extra add).
    acc = b + x * w[:, 4:5]

    for dh in (-1, 0, 1):
        for dw in (-1, 0, 1):
            if dh == 0 and dw == 0:
                continue
            k = (dh + 1) * 3 + (dw + 1)
            off = dh * W + dw + P                          # static slice start, in [0, 2W+2]
            shifted = xpad[:, off:off + L]                 # == x[(h+dh)*W + (w+dw)] or 0 at row edges
            term = shifted * w[:, k:k + 1]
            if w_ok[dw] is not None:
                term = jnp.where(w_ok[dw], term, 0.0)      # zero when w+dw leaves [0, W)
            acc = acc + term

    o_ref[0] = acc.astype(o_ref.dtype)


# ----------------------------------------------------------------------------- wrapper
def dwconv_forward(x_nchw, weight, bias, *, ct=None):
    """x_nchw: (B, C, H, W); weight: (C, 1, 3, 3) PyTorch depthwise layout; bias: (C,)."""
    B, C, H, W = x_nchw.shape
    L = H * W

    xf = x_nchw.reshape(B, C, L).astype(jnp.float32)       # free reshape (NCHW-contiguous)
    w9 = weight.reshape(C, 9).astype(jnp.float32)
    b2 = bias.reshape(C, 1).astype(jnp.float32)

    # Channel tile: depthwise channels are independent -> tile C (no halo needed)
    # to bound per-step VMEM at production sizes (dim=768, large H*W).
    if ct is None:
        ct = C
        target = max(8, (2 << 20) // (L * 4))              # ~2 MiB per live (ct, L) f32 slab
        if C > target and C % 8 == 0:
            ct = 8
            for cand in range(target - target % 8, 7, -8):
                if C % cand == 0:
                    ct = cand
                    break
    assert C % ct == 0, (C, ct)

    block_bytes = ct * L * 4
    vmem_limit = int(min(max(32 << 20, 10 * block_bytes), 64 << 20))

    kernel = partial(_dwconv_kernel, H=H, W=W)

    y = pl.pallas_call(
        kernel,
        out_shape=jax.ShapeDtypeStruct((B, C, L), jnp.float32),
        grid_spec=pltpu.PrefetchScalarGridSpec(
            num_scalar_prefetch=0,
            grid=(B, C // ct),
            in_specs=[
                pl.BlockSpec((1, ct, L), lambda b, c: (b, c, 0)),   # x slab (lane-dense last dim)
                pl.BlockSpec((ct, 9), lambda b, c: (c, 0)),         # 3x3 taps per channel
                pl.BlockSpec((ct, 1), lambda b, c: (c, 0)),         # bias per channel
            ],
            out_specs=pl.BlockSpec((1, ct, L), lambda b, c: (b, c, 0)),
        ),
        compiler_params=pltpu.CompilerParams(
            dimension_semantics=("parallel", "parallel"),
            vmem_limit_bytes=vmem_limit),
    )(xf, w9, b2)

    return y.reshape(B, C, H, W)


# ----------------------------------------------------------------------------- pure-JAX reference
def reference_forward(x_nchw, weight, bias):
    B, C, H, W = x_nchw.shape
    out = jax.lax.conv_general_dilated(
        x_nchw, weight, window_strides=(1, 1), padding=((1, 1), (1, 1)),
        dimension_numbers=('NCHW', 'OIHW', 'NCHW'), feature_group_count=C)
    return out + bias.reshape(1, C, 1, 1)


# ----------------------------------------------------------------------------- main
if __name__ == "__main__":
    B, C, H, W = 2, 4, 16, 16          # small test shape (module default dim=768 also supported)

    key = jax.random.PRNGKey(0)
    kx, kw, kb = jax.random.split(key, 3)

    x = jax.random.normal(kx, (B, C, H, W), jnp.float32)
    weight = jax.random.normal(kw, (C, 1, 3, 3), jnp.float32) * math.sqrt(2.0 / 9.0)
    bias = jax.random.normal(kb, (C,), jnp.float32) * 0.1

    y = dwconv_forward(x, weight, bias)
    jax.block_until_ready(y)

    y_ref = reference_forward(x, weight, bias)
    np.testing.assert_allclose(np.asarray(y), np.asarray(y_ref), atol=1e-4, rtol=1e-4)

    print("KERNEL_OK")
</pallas_src>

<mosaic_0001>
module attributes {stable_mosaic.version = 11 : i64} {
  func.func @_dwconv_kernel(%arg0: i32, %arg1: i32, %arg2: memref<1x4x256xf32, #tpu.memory_space<vmem>>, %arg3: memref<4x9xf32, #tpu.memory_space<vmem>>, %arg4: memref<4x1xf32, #tpu.memory_space<vmem>>, %arg5: memref<1x4x256xf32, #tpu.memory_space<vmem>>) attributes {dimension_semantics = [#tpu.dimension_semantics<parallel>, #tpu.dimension_semantics<parallel>], iteration_bounds = array<i64: 2, 1>, scalar_prefetch = 0 : i64, scratch_operands = 0 : i64, tpu.core_type = #tpu.core_type<tc>, window_params = [{transform_indices = @transform_0, window_bounds = array<i64: 1, 4, 256>}, {transform_indices = @transform_1, window_bounds = array<i64: 4, 9>}, {transform_indices = @transform_2, window_bounds = array<i64: 4, 1>}, {transform_indices = @transform_3, window_bounds = array<i64: 1, 4, 256>}]} {
    %c0 = arith.constant 0 : index
    %c0_0 = arith.constant 0 : index
    %c0_1 = arith.constant 0 : index
    %0 = vector.load %arg2[%c0, %c0_0, %c0_1] : memref<1x4x256xf32, #tpu.memory_space<vmem>>, vector<1x4x256xf32>
    %1 = vector.shape_cast %0 : vector<1x4x256xf32> to vector<4x256xf32>
    %c0_2 = arith.constant 0 : index
    %c0_3 = arith.constant 0 : index
    %2 = vector.load %arg3[%c0_2, %c0_3] : memref<4x9xf32, #tpu.memory_space<vmem>>, vector<4x9xf32>
    %c0_4 = arith.constant 0 : index
    %c0_5 = arith.constant 0 : index
    %3 = vector.load %arg4[%c0_4, %c0_5] : memref<4x1xf32, #tpu.memory_space<vmem>>, vector<4x1xf32>
    %cst = arith.constant 0.000000e+00 : f32
    %4 = vector.broadcast %cst : f32 to vector<4x17xf32>
    %5 = tpu.concatenate %4, %1, %4 in 1 : vector<4x17xf32>, vector<4x256xf32>, vector<4x17xf32> -> vector<4x290xf32>
    %6 = tpu.iota {dimensions = array<i32: 1>} : vector<1x256xi32>
    %c16_i32 = arith.constant 16 : i32
    %c0_i32 = arith.constant 0 : i32
    %7 = arith.cmpi eq, %c16_i32, %c0_i32 : i32
    %c1_i32 = arith.constant 1 : i32
    %8 = arith.select %7, %c1_i32, %c16_i32 : i32
    %9 = vector.broadcast %8 : i32 to vector<1x256xi32>
    %10 = arith.remsi %6, %9 : vector<1x256xi32>
    %c0_i32_6 = arith.constant 0 : i32
    %11 = vector.broadcast %c0_i32_6 : i32 to vector<1x256xi32>
    %12 = arith.cmpi ne, %10, %11 : vector<1x256xi32>
    %c0_i32_7 = arith.constant 0 : i32
    %13 = vector.broadcast %c0_i32_7 : i32 to vector<1x256xi32>
    %14 = arith.cmpi slt, %10, %13 : vector<1x256xi32>
    %c0_i32_8 = arith.constant 0 : i32
    %15 = arith.cmpi slt, %8, %c0_i32_8 : i32
    %16 = vector.broadcast %15 : i1 to vector<1x256xi1>
    %17 = vector.broadcast %16 : vector<1x256xi1> to vector<1x256xi1>
    %18 = arith.xori %14, %17 : vector<1x256xi1>
    %19 = arith.andi %18, %12 : vector<1x256xi1>
    %20 = vector.broadcast %8 : i32 to vector<1x256xi32>
    %21 = arith.addi %10, %20 : vector<1x256xi32>
    %22 = arith.select %19, %21, %10 : vector<1x256xi1>, vector<1x256xi32>
    %c1_i32_9 = arith.constant 1 : i32
    %23 = vector.broadcast %c1_i32_9 : i32 to vector<1x256xi32>
    %24 = arith.cmpi sge, %22, %23 : vector<1x256xi32>
    %c14_i32 = arith.constant 14 : i32
    %25 = vector.broadcast %c14_i32 : i32 to vector<1x256xi32>
    %26 = arith.cmpi sle, %22, %25 : vector<1x256xi32>
    %27 = vector.extract_strided_slice %2 {offsets = [0, 4], sizes = [4, 1], strides = [1, 1]} : vector<4x9xf32> to vector<4x1xf32>
    %28 = vector.broadcast %27 : vector<4x1xf32> to vector<4x256xf32>
    %29 = arith.mulf %1, %28 : vector<4x256xf32>
    %30 = vector.broadcast %3 : vector<4x1xf32> to vector<4x256xf32>
    %31 = arith.addf %30, %29 : vector<4x256xf32>
    %32 = vector.extract_strided_slice %5 {offsets = [0, 0], sizes = [4, 256], strides = [1, 1]} : vector<4x290xf32> to vector<4x256xf32>
    %33 = vector.extract_strided_slice %2 {offsets = [0, 0], sizes = [4, 1], strides = [1, 1]} : vector<4x9xf32> to vector<4x1xf32>
    %34 = vector.broadcast %33 : vector<4x1xf32> to vector<4x256xf32>
    %35 = arith.mulf %32, %34 : vector<4x256xf32>
    %cst_10 = arith.constant 0.000000e+00 : f32
    %36 = vector.shape_cast %24 : vector<1x256xi1> to vector<1x256xi1>
    %37 = vector.broadcast %36 : vector<1x256xi1> to vector<4x256xi1>
    %38 = vector.broadcast %cst_10 : f32 to vector<4x256xf32>
    %39 = arith.select %37, %35, %38 : vector<4x256xi1>, vector<4x256xf32>
    %40 = arith.addf %31, %39 : vector<4x256xf32>
    %41 = vector.extract_strided_slice %5 {offsets = [0, 1], sizes = [4, 256], strides = [1, 1]} : vector<4x290xf32> to vector<4x256xf32>
    %42 = vector.extract_strided_slice %2 {offsets = [0, 1], sizes = [4, 1], strides = [1, 1]} : vector<4x9xf32> to vector<4x1xf32>
    %43 = vector.broadcast %42 : vector<4x1xf32> to vector<4x256xf32>
    %44 = arith.mulf %41, %43 : vector<4x256xf32>
    %45 = arith.addf %40, %44 : vector<4x256xf32>
    %46 = vector.extract_strided_slice %5 {offsets = [0, 2], sizes = [4, 256], strides = [1, 1]} : vector<4x290xf32> to vector<4x256xf32>
    %47 = vector.extract_strided_slice %2 {offsets = [0, 2], sizes = [4, 1], strides = [1, 1]} : vector<4x9xf32> to vector<4x1xf32>
    %48 = vector.broadcast %47 : vector<4x1xf32> to vector<4x256xf32>
    %49 = arith.mulf %46, %48 : vector<4x256xf32>
    %cst_11 = arith.constant 0.000000e+00 : f32
    %50 = vector.shape_cast %26 : vector<1x256xi1> to vector<1x256xi1>
    %51 = vector.broadcast %50 : vector<1x256xi1> to vector<4x256xi1>
    %52 = vector.broadcast %cst_11 : f32 to vector<4x256xf32>
    %53 = arith.select %51, %49, %52 : vector<4x256xi1>, vector<4x256xf32>
    %54 = arith.addf %45, %53 : vector<4x256xf32>
    %55 = vector.extract_strided_slice %5 {offsets = [0, 16], sizes = [4, 256], strides = [1, 1]} : vector<4x290xf32> to vector<4x256xf32>
    %56 = vector.extract_strided_slice %2 {offsets = [0, 3], sizes = [4, 1], strides = [1, 1]} : vector<4x9xf32> to vector<4x1xf32>
    %57 = vector.broadcast %56 : vector<4x1xf32> to vector<4x256xf32>
    %58 = arith.mulf %55, %57 : vector<4x256xf32>
    %cst_12 = arith.constant 0.000000e+00 : f32
    %59 = vector.shape_cast %24 : vector<1x256xi1> to vector<1x256xi1>
    %60 = vector.broadcast %59 : vector<1x256xi1> to vector<4x256xi1>
    %61 = vector.broadcast %cst_12 : f32 to vector<4x256xf32>
    %62 = arith.select %60, %58, %61 : vector<4x256xi1>, vector<4x256xf32>
    %63 = arith.addf %54, %62 : vector<4x256xf32>
    %64 = vector.extract_strided_slice %5 {offsets = [0, 18], sizes = [4, 256], strides = [1, 1]} : vector<4x290xf32> to vector<4x256xf32>
    %65 = vector.extract_strided_slice %2 {offsets = [0, 5], sizes = [4, 1], strides = [1, 1]} : vector<4x9xf32> to vector<4x1xf32>
    %66 = vector.broadcast %65 : vector<4x1xf32> to vector<4x256xf32>
    %67 = arith.mulf %64, %66 : vector<4x256xf32>
    %cst_13 = arith.constant 0.000000e+00 : f32
    %68 = vector.shape_cast %26 : vector<1x256xi1> to vector<1x256xi1>
    %69 = vector.broadcast %68 : vector<1x256xi1> to vector<4x256xi1>
    %70 = vector.broadcast %cst_13 : f32 to vector<4x256xf32>
    %71 = arith.select %69, %67, %70 : vector<4x256xi1>, vector<4x256xf32>
    %72 = arith.addf %63, %71 : vector<4x256xf32>
    %73 = vector.extract_strided_slice %5 {offsets = [0, 32], sizes = [4, 256], strides = [1, 1]} : vector<4x290xf32> to vector<4x256xf32>
    %74 = vector.extract_strided_slice %2 {offsets = [0, 6], sizes = [4, 1], strides = [1, 1]} : vector<4x9xf32> to vector<4x1xf32>
    %75 = vector.broadcast %74 : vector<4x1xf32> to vector<4x256xf32>
    %76 = arith.mulf %73, %75 : vector<4x256xf32>
    %cst_14 = arith.constant 0.000000e+00 : f32
    %77 = vector.shape_cast %24 : vector<1x256xi1> to vector<1x256xi1>
    %78 = vector.broadcast %77 : vector<1x256xi1> to vector<4x256xi1>
    %79 = vector.broadcast %cst_14 : f32 to vector<4x256xf32>
    %80 = arith.select %78, %76, %79 : vector<4x256xi1>, vector<4x256xf32>
    %81 = arith.addf %72, %80 : vector<4x256xf32>
    %82 = vector.extract_strided_slice %5 {offsets = [0, 33], sizes = [4, 256], strides = [1, 1]} : vector<4x290xf32> to vector<4x256xf32>
    %83 = vector.extract_strided_slice %2 {offsets = [0, 7], sizes = [4, 1], strides = [1, 1]} : vector<4x9xf32> to vector<4x1xf32>
    %84 = vector.broadcast %83 : vector<4x1xf32> to vector<4x256xf32>
    %85 = arith.mulf %82, %84 : vector<4x256xf32>
    %86 = arith.addf %81, %85 : vector<4x256xf32>
    %87 = vector.extract_strided_slice %5 {offsets = [0, 34], sizes = [4, 256], strides = [1, 1]} : vector<4x290xf32> to vector<4x256xf32>
    %88 = vector.extract_strided_slice %2 {offsets = [0, 8], sizes = [4, 1], strides = [1, 1]} : vector<4x9xf32> to vector<4x1xf32>
    %89 = vector.broadcast %88 : vector<4x1xf32> to vector<4x256xf32>
    %90 = arith.mulf %87, %89 : vector<4x256xf32>
    %cst_15 = arith.constant 0.000000e+00 : f32
    %91 = vector.shape_cast %26 : vector<1x256xi1> to vector<1x256xi1>
    %92 = vector.broadcast %91 : vector<1x256xi1> to vector<4x256xi1>
    %93 = vector.broadcast %cst_15 : f32 to vector<4x256xf32>
    %94 = arith.select %92, %90, %93 : vector<4x256xi1>, vector<4x256xf32>
    %95 = arith.addf %86, %94 : vector<4x256xf32>
    %c0_16 = arith.constant 0 : index
    %c0_17 = arith.constant 0 : index
    %c0_18 = arith.constant 0 : index
    %96 = vector.load %arg5[%c0_16, %c0_17, %c0_18] : memref<1x4x256xf32, #tpu.memory_space<vmem>>, vector<1x4x256xf32>
    %97 = vector.shape_cast %96 : vector<1x4x256xf32> to vector<4x256xf32>
    %98 = vector.shape_cast %95 : vector<4x256xf32> to vector<1x4x256xf32>
    tpu.vector_store %arg5[%c0_16, %c0_17, %c0_18], %98 {strides = array<i32>} : memref<1x4x256xf32, #tpu.memory_space<vmem>>, vector<1x4x256xf32>,
    return
  }
  func.func @transform_0(%arg0: i32, %arg1: i32) -> (i32, i32, i32) {
    %c0_i32 = arith.constant 0 : i32
    %c0_i32_0 = arith.constant 0 : i32
    return %arg0, %arg1, %c0_i32 : i32, i32, i32
  }
  func.func @transform_1(%arg0: i32, %arg1: i32) -> (i32, i32) {
    %c0_i32 = arith.constant 0 : i32
    %c0_i32_0 = arith.constant 0 : i32
    return %arg1, %c0_i32 : i32, i32
  }
  func.func @transform_2(%arg0: i32, %arg1: i32) -> (i32, i32) {
    %c0_i32 = arith.constant 0 : i32
    %c0_i32_0 = arith.constant 0 : i32
    return %arg1, %c0_i32 : i32, i32
  }
  func.func @transform_3(%arg0: i32, %arg1: i32) -> (i32, i32, i32) {
    %c0_i32 = arith.constant 0 : i32
    %c0_i32_0 = arith.constant 0 : i32
    return %arg0, %arg1, %c0_i32 : i32, i32, i32
  }
}

</mosaic_0001>

<llo_original>
// kernel: tpu_custom_call.1
$region0: #{tpu_custom_call.1}
  #allocation0 [shape = 'u32[]', space=smem, size = 0x4, offset = 0x4, fixed_abs, tag = 'smem constant byte address 0x4 - core index']
  #allocation1 [shape = 'u32[72,128]{1,0:T(1,128)}', space=vmem, size = 0x9000, scoped, tag = 'internal scratch']
  %s0 = inlined_call_operand.hbm [shape: f32[2,4,256], index: 0, kind: input, shape index: {}]
  %s1 = inlined_call_operand.vmem [shape: f32[4,9], index: 1, kind: input, shape index: {}]
  %s2 = inlined_call_operand.vmem [shape: f32[4,1], index: 2, kind: input, shape index: {}]
  %s3 = inlined_call_operand.hbm [shape: f32[2,4,256], index: 3, kind: output, shape index: {}]
  %s4 = sld [smem:[#allocation0]]
  $region49: #{tpu_custom_call.1} parent=0
    _
  %s6 = ssub.s32 1, %s4
  %s7 = scalar_select 0, %s6, %s4
  $region1: #{tpu_custom_call.1} parent=0
    #allocation2 [shape = 'u8[8192]{0}', space=vmem, size = 0x2000, scoped, tag = 'input window, operand 0']
    #allocation3 [shape = 's32[2]{0}', space=sflag, size = 0x8, scoped, tag = 'scoped memory for tpu_custom_call.1']
    #allocation4 [shape = 's32[2]{0}', space=sflag, size = 0x8, scoped, tag = 'scoped memory for tpu_custom_call.1']
    #allocation5 [shape = 'u8[8192]{0}', space=vmem, size = 0x2000, scoped, tag = 'output window, operand 0']
    %8 = vsyncpa [#allocation3], 0
    %s9 = scalar_lea.sflag [#allocation3], 1
    %10 = vsyncpa %s9, 0
    %11 = vsyncpa [#allocation4], 0
    %s12 = scalar_lea.sflag [#allocation4], 1
    %13 = vsyncpa %s12, 0
    loop: start=0, step=1, limit=4
    $region2: #{tpu_custom_call.1} parent=1 // loop_pre_header
      _
    $region3: #{tpu_custom_call.1} parent=1 // loop_header
      %s15 = sphi 0, %s19
      %p16 = scmp.ge.s32.totalorder %s15, 4
      %s22 = sphi 0, %s34
      %s23 = sphi 0, %s30
      %s24 = sphi 0, %s22
      %s25 = sphi 0, %s23
      %s26 = sphi 0, %s24
      %s27 = sphi 0, %s25
      %s39 = sphi 0, %s41
      %s42 = sphi 0, %s39
      %s43 = sphi 0, %s42
      %s59 = sphi 0, %s43
      %s65 = sphi 0, %s67
      %s68 = sphi 0, %s65
      %s69 = sphi 0, %s68
      %s85 = sphi 0, %s69
      %s91 = sphi 0, %s93
      %s94 = sphi 0, %s91
      %s95 = sphi 0, %s94
      %s111 = sphi 0, %s95
      %s119 = sphi 0, %s121
      %s122 = sphi 0, %s119
      %s123 = sphi 0, %s122
      %s139 = sphi 0, %s123
    $region4: #{tpu_custom_call.1} parent=1 // loop_header_branch
      %18 = sbr.rel (%p16) target = $region8
    $region5: #{tpu_custom_call.1} parent=1 // loop_body
      %s20 = ssub.s32 %s15, 1
      %s21 = ssub.s32 %s15, 2
      %s28 = sadd.s32 1, %s23
      %p29 = scmp.ge.s32.totalorder %s28, 1
      %s30 = scalar_select %p29, 0, %s28
      %s31 = sadd.s32 1, %s22
      %s32 = scalar_select %p29, %s31, %s22
      %p33 = scmp.ge.s32.totalorder %s32, 2
      %s34 = scalar_select %p33, 0, %s32
      %s35 = ssub.s32 %s22, %s34
      %s36 = ssub.s32 %s23, %s30
      %s37 = sor.u32 %s35, %s36
      %p38 = scmp.eq.s32.totalorder %s37, 0
      %s40 = sadd.s32 %s39, 1
      %s41 = scalar_select %p38, %s39, %s40
      %p44 = pneg %p38
      %p45 = scmp.eq.s32.totalorder %s15, 1
      %p46 = por %p44, %p45
      %p47 = scmp.ne.s32.totalorder %s39, %s42
      %p48 = scmp.eq.s32.totalorder %s15, 0
      %p49 = por %p47, %p48
      %p50 = scmp.ne.s32.totalorder %s39, %s42
      %p51 = scmp.eq.s32.totalorder %s20, 1
      %p52 = por %p50, %p51
      %p53 = scmp.ne.s32.totalorder %s42, %s43
      %p54 = scmp.eq.s32.totalorder %s20, 0
      %p55 = por %p53, %p54
      %p56 = scmp.ne.s32.totalorder %s42, %s43
      %p57 = scmp.eq.s32.totalorder %s21, 1
      %p58 = por %p56, %p57
      %p60 = scmp.ne.s32.totalorder %s43, %s59
      %p61 = scmp.eq.s32.totalorder %s21, 0
      %p62 = por %p60, %p61
      %s63 = ssub.s32 %s23, %s30
      %p64 = scmp.eq.s32.totalorder %s63, 0
      %s66 = sadd.s32 %s65, 1
      %s67 = scalar_select %p64, %s65, %s66
      %p70 = pneg %p64
      %p71 = scmp.eq.s32.totalorder %s15, 1
      %p72 = por %p70, %p71
      %p73 = scmp.ne.s32.totalorder %s65, %s68
      %p74 = scmp.eq.s32.totalorder %s15, 0
      %p75 = por %p73, %p74
      %p76 = scmp.ne.s32.totalorder %s65, %s68
      %p77 = scmp.eq.s32.totalorder %s20, 1
      %p78 = por %p76, %p77
      %p79 = scmp.ne.s32.totalorder %s68, %s69
      %p80 = scmp.eq.s32.totalorder %s20, 0
      %p81 = por %p79, %p80
      %p82 = scmp.ne.s32.totalorder %s68, %s69
      %p83 = scmp.eq.s32.totalorder %s21, 1
      %p84 = por %p82, %p83
      %p86 = scmp.ne.s32.totalorder %s69, %s85
      %p87 = scmp.eq.s32.totalorder %s21, 0
      %p88 = por %p86, %p87
      %s89 = ssub.s32 %s23, %s30
      %p90 = scmp.eq.s32.totalorder %s89, 0
      %s92 = sadd.s32 %s91, 1
      %s93 = scalar_select %p90, %s91, %s92
      %p96 = pneg %p90
      %p97 = scmp.eq.s32.totalorder %s15, 1
      %p98 = por %p96, %p97
      %p99 = scmp.ne.s32.totalorder %s91, %s94
      %p100 = scmp.eq.s32.totalorder %s15, 0
      %p101 = por %p99, %p100
      %p102 = scmp.ne.s32.totalorder %s91, %s94
      %p103 = scmp.eq.s32.totalorder %s20, 1
      %p104 = por %p102, %p103
      %p105 = scmp.ne.s32.totalorder %s94, %s95
      %p106 = scmp.eq.s32.totalorder %s20, 0
      %p107 = por %p105, %p106
      %p108 = scmp.ne.s32.totalorder %s94, %s95
      %p109 = scmp.eq.s32.totalorder %s21, 1
      %p110 = por %p108, %p109
      %p112 = scmp.ne.s32.totalorder %s95, %s111
      %p113 = scmp.eq.s32.totalorder %s21, 0
      %p114 = por %p112, %p113
      %s115 = ssub.s32 %s22, %s34
      %s116 = ssub.s32 %s23, %s30
      %s117 = sor.u32 %s115, %s116
      %p118 = scmp.eq.s32.totalorder %s117, 0
      %s120 = sadd.s32 %s119, 1
      %s121 = scalar_select %p118, %s119, %s120
      %p124 = pneg %p118
      %p125 = scmp.eq.s32.totalorder %s15, 1
      %p126 = por %p124, %p125
      %p127 = scmp.ne.s32.totalorder %s119, %s122
      %p128 = scmp.eq.s32.totalorder %s15, 0
      %p129 = por %p127, %p128
      %p130 = scmp.ne.s32.totalorder %s119, %s122
      %p131 = scmp.eq.s32.totalorder %s20, 1
      %p132 = por %p130, %p131
      %p133 = scmp.ne.s32.totalorder %s122, %s123
      %p134 = scmp.eq.s32.totalorder %s20, 0
      %p135 = por %p133, %p134
      %p136 = scmp.ne.s32.totalorder %s122, %s123
      %p137 = scmp.eq.s32.totalorder %s21, 1
      %p138 = por %p136, %p137
      %p140 = scmp.ne.s32.totalorder %s123, %s139
      %p141 = scmp.eq.s32.totalorder %s21, 0
      %p142 = por %p140, %p141
      %p143 = scmp.le.s32.totalorder 1, %s15
      %p144 = scmp.lt.s32.totalorder %s15, 3
      %p145 = pnand %p143, %p144
      %p146 = pneg %p145
      // Predicated region
      $region9: #{tpu_custom_call.1} parent=5 // pred_check
        _
      $region10: #{tpu_custom_call.1} parent=5 // pred_check_branch
        %148 = sbr.rel (%p145) target = $region12
      $region11: #{tpu_custom_call.1} parent=5 // pred_region
        %s149 = ssub.s32 %s15, 1
        // Predicated region
        $region13: #{tpu_custom_call.1} parent=11 // pred_check
          %p150 = pneg %p81
        $region14: #{tpu_custom_call.1} parent=11 // pred_check_branch
          %152 = sbr.rel (%p150) target = $region16
        $region15: #{tpu_custom_call.1} parent=11 // pred_region
          %p153 = scmp.lt.s32.totalorder %s25, 0
          %s154 = scalar_select %p153, %s25, 0
          %s155 = smul.addr %s154, 4
          %s156 = scalar_lea.vmem %s1, %s155
        $region16: #{tpu_custom_call.1} parent=11 // pred_fallthru
          _
        // Predicated region
        $region17: #{tpu_custom_call.1} parent=11 // pred_check
          %p157 = pneg %p107
        $region18: #{tpu_custom_call.1} parent=11 // pred_check_branch
          %159 = sbr.rel (%p157) target = $region20
        $region19: #{tpu_custom_call.1} parent=11 // pred_region
          %p160 = scmp.lt.s32.totalorder %s25, 0
          %s161 = scalar_select %p160, %s25, 0
          %s162 = smul.addr %s161, 4
          %s163 = scalar_lea.vmem %s2, %s162
        $region20: #{tpu_custom_call.1} parent=11 // pred_fallthru
          _
      $region12: #{tpu_custom_call.1} parent=5 // pred_fallthru
        _
      %p164 = scmp.lt.s32.totalorder %s15, 2
      // Predicated region
      $region21: #{tpu_custom_call.1} parent=5 // pred_check
        %p165 = pneg %p164
      $region22: #{tpu_custom_call.1} parent=5 // pred_check_branch
        %167 = sbr.rel (%p165) target = $region24
      $region23: #{tpu_custom_call.1} parent=5 // pred_region
        // Predicated region
        $region25: #{tpu_custom_call.1} parent=23 // pred_check
          %p168 = pneg %p49
        $region26: #{tpu_custom_call.1} parent=23 // pred_check_branch
          %170 = sbr.rel (%p168) target = $region28
        $region27: #{tpu_custom_call.1} parent=23 // pred_region
          %s171 = sand.u32 %s39, 1
          %s172 = scalar_lea.sflag [#allocation3], %s171
          %s173 = sand.u32 %s39, 1
          %s174 = smul.addr %s173, 8
          %s175 = scalar_lea.vmem [#allocation2], %s174
          %177 = vsyncadd %s172, 0
          %s178 = smul.addr %s23, 2
          %s179 = smul.addr %s22, 2
          %s180 = sadd.s32 %s178, %s179
          %s181 = smul.addr %s180, 4
          %s182 = scalar_lea.hbm %s0, %s181
          %s184 = sshll.u32 %s182, 4
          %s185 = int_to_ptr.hbm [resolvable:$true] %s184
          %s186 = sshll.u32 %s175, 4
          %s187 = int_to_ptr.vmem [resolvable:$true] %s186
          %189 = dma.hbm_to_vmem [thread:$0]  %s185, 128, %s187, %s172
        $region28: #{tpu_custom_call.1} parent=23 // pred_fallthru
          _
      $region24: #{tpu_custom_call.1} parent=5 // pred_fallthru
        _
      %p190 = scmp.le.s32.totalorder 1, %s15
      %p191 = scmp.lt.s32.totalorder %s15, 3
      %p192 = pnand %p190, %p191
      %p193 = pneg %p192
      // Predicated region
      $region29: #{tpu_custom_call.1} parent=5 // pred_check
        _
      $region30: #{tpu_custom_call.1} parent=5 // pred_check_branch
        %195 = sbr.rel (%p192) target = $region32
      $region31: #{tpu_custom_call.1} parent=5 // pred_region
        %s196 = ssub.s32 %s15, 1
        %s197 = sand.u32 %s42, 1
        %s198 = scalar_lea.sflag [#allocation3], %s197
        %s199 = sand.u32 %s42, 1
        %s200 = smul.addr %s199, 8
        %s201 = scalar_lea.vmem [#allocation2], %s200
        // Predicated region
        $region33: #{tpu_custom_call.1} parent=31 // pred_check
          %p202 = pneg %p55
        $region34: #{tpu_custom_call.1} parent=31 // pred_check_branch
          %204 = sbr.rel (%p202) target = $region36
        $region35: #{tpu_custom_call.1} parent=31 // pred_region
          %206 = dma.done %s198, 128
        $region36: #{tpu_custom_call.1} parent=31 // pred_fallthru
          _
        %s207 = sand.u32 %s42, 1
        %s208 = scalar_lea.sflag [#allocation3], %s207
        %s209 = sand.u32 %s42, 1
        %s210 = smul.addr %s209, 8
        %s211 = scalar_lea.vmem [#allocation2], %s210
        %p212 = pneg %p55
        %p213 = pneg %p52
        %p214 = scmp.lt.s32.totalorder %s25, 0
        %s215 = scalar_select %p214, %s25, 0
        %s216 = smul.addr %s215, 4
        %s217 = scalar_lea.vmem %s1, %s216
        %p218 = pneg %p81
        %p219 = pneg %p78
        %p220 = scmp.lt.s32.totalorder %s25, 0
        %s221 = scalar_select %p220, %s25, 0
        %s222 = smul.addr %s221, 4
        %s223 = scalar_lea.vmem %s2, %s222
        %p224 = pneg %p107
        %p225 = pneg %p104
        %p226 = pneg %p135
        %p227 = pneg %p132
        %s228 = sand.u32 %s122, 1
        %s229 = scalar_lea.sflag [#allocation4], %s228
        %s230 = sand.u32 %s122, 1
        %s231 = smul.addr %s230, 8
        %s232 = scalar_lea.vmem [#allocation5], %s231
        %p233 = scmp.lt.s32.totalorder %s25, 0
        %s234 = scalar_select %p233, %s25, 0
        %s235 = smul.addr %s234, 4
        %s236 = scalar_lea.vmem %s1, %s235
        %p237 = scmp.lt.s32.totalorder %s25, 0
        %s238 = scalar_select %p237, %s25, 0
        %s239 = smul.addr %s238, 4
        %s240 = scalar_lea.vmem %s2, %s239
        %v241 = vld [vmem:[%s201] sm:$0xff]
        %v242 = vld [vmem:[%s236] sm:$0xf]
        %v243 = vld [vmem:[%s240] sm:$0xf]
        %245 = vst [vmem:[#allocation1] ss:$2 sm:$0xff] %v241
        %v246 = vld.sshfl [vmem:[#allocation1] sm:$0xff pattern:$0x75316420]
        %v247 = vld.sshfl [vmem:[#allocation1 + $0x8] sm:$0xff pattern:$0x75316420]
        %248 = vrot.lane.b32.xlu0 %v246, 17
        %v249 = vpop.permute.xlu0 %248
        %250 = vrot.lane.b32.xlu0 %v247, 17
        %v251 = vpop.permute.xlu0 %250
        %vm252 = vcmask 138240
        %v253 = vsel %vm252, %v249, %v251
        %v257 = vsel %vm252, 0.0, %v249
        %v258 = vsel %vm252, %v251, 0.0
        %v259 = vlaneseq
        %v260 = vand.u32 %v259, 127
        %v261 = vadd.s32 %v260, 128
        %vm262 = vcmp.lt.s32.totalorder %v260, 0
        %v263 = vsub.s32 0, %v260
        %v264 = vsel %vm262, %v263, %v260
        %v265 = vshrl.u32 %v264, 4
        %v266 = vand.u32 %v264, 15
        %v267 = vsub.s32 0, %v266
        %v268 = vsel %vm262, %v267, %v266
        %vm269 = vcmp.lt.s32.totalorder %v261, 0
        %v270 = vsub.s32 0, %v261
        %v271 = vsel %vm269, %v270, %v261
        %v272 = vshrl.u32 %v271, 4
        %v273 = vand.u32 %v271, 15
        %v274 = vsub.s32 0, %v273
        %v275 = vsel %vm269, %v274, %v273
        %vm276 = vcmp.ne.s32.totalorder %v268, 0
        %vm277 = vcmp.ne.s32.totalorder %v275, 0
        %vm278 = vcmp.lt.s32.totalorder %v268, 0
        %vm279 = vcmp.lt.s32.totalorder %v275, 0
        %vm280 = vmand %vm278, %vm276
        %vm281 = vmand %vm279, %vm277
        %v282 = vadd.s32 %v268, 16
        %v283 = vadd.s32 %v275, 16
        %v284 = vsel %vm280, %v282, %v268
        %v285 = vsel %vm281, %v283, %v275
        %vm286 = vcmp.ge.s32.totalorder %v284, 1
        %vm287 = vcmp.ge.s32.totalorder %v285, 1
        %vm288 = vcmp.le.s32.totalorder %v284, 14
        %vm289 = vcmp.le.s32.totalorder %v285, 14
        %291 = vset.pattern.permute.xlu0 4
        %292 = vperm.xlu0 %291, %v242
        %v293 = vpop.permute.xlu0 %292
        %v295 = vunpack.c.l.s4 839922192
        %v296 = vunpack.c.0.s8 %v295
        %v297 = vperm.slane %v293, %v296
        %v299 = vmul.f32 %v241, %v297
        %301 = vset.pattern.permute.xlu0 0
        %302 = vperm.xlu0 %301, %v243
        %v303 = vpop.permute.xlu0 %302
        %306 = vst [vmem:[#allocation1] ss:$2 sm:$0xff] %v299
        %v307 = vld.sshfl [vmem:[#allocation1] sm:$0xff pattern:$0x75316420]
        %v308 = vld.sshfl [vmem:[#allocation1 + $0x8] sm:$0xff pattern:$0x75316420]
        %v311 = vadd.f32 %v303, %v307
        %v312 = vadd.f32 %v303, %v308
        %313 = vset.pattern.permute.xlu0 0
        %314 = vperm.xlu0 %313, %v242
        %v315 = vpop.permute.xlu0 %314
        %v317 = vmul.f32 %v257, %v315
        %v318 = vmul.f32 %v253, %v315
        %v319 = vsel %vm286, 1, 0
        %v320 = vsel %vm287, 1, 0
        %vm321 = vcmp.eq.s32.totalorder %v319, 1
        %vm322 = vcmp.eq.s32.totalorder %v320, 1
        %v323 = vsel %vm321, %v317, 0.0
        %v324 = vsel %vm322, %v318, 0.0
        %v325 = vadd.f32 %v311, %v323
        %v326 = vadd.f32 %v312, %v324
        %327 = vset.pattern.permute.xlu0 1
        %328 = vperm.xlu0 %327, %v242
        %v329 = vpop.permute.xlu0 %328
        %v331 = vmul.f32 %v257, %v329
        %v332 = vmul.f32 %v253, %v329
        %v333 = vmul.f32 %v258, %v329
        %337 = vrot.lane.b32.xlu0 %v331, 127
        %v338 = vpop.permute.xlu0 %337
        %339 = vrot.lane.b32.xlu0 %v332, 127
        %v340 = vpop.permute.xlu0 %339
        %341 = vrot.lane.b32.xlu0 %v333, 127
        %v342 = vpop.permute.xlu0 %341
        %vm343 = vcmask 1039360
        %v344 = vsel %vm343, %v338, %v340
        %v345 = vsel %vm343, %v340, %v342
        %v348 = vadd.f32 %v325, %v344
        %v349 = vadd.f32 %v326, %v345
        %350 = vset.pattern.permute.xlu0 2
        %351 = vperm.xlu0 %350, %v242
        %v352 = vpop.permute.xlu0 %351
        %v354 = vmul.f32 %v257, %v352
        %v355 = vmul.f32 %v253, %v352
        %v356 = vmul.f32 %v258, %v352
        %v357 = vsel %vm288, 1, 0
        %v358 = vsel %vm289, 1, 0
        %vm359 = vcmp.eq.s32.totalorder %v357, 1
        %vm360 = vcmp.eq.s32.totalorder %v358, 1
        %364 = vrot.lane.b32.xlu0 %v354, 126
        %v365 = vpop.permute.xlu0 %364
        %366 = vrot.lane.b32.xlu0 %v355, 126
        %v367 = vpop.permute.xlu0 %366
        %368 = vrot.lane.b32.xlu0 %v356, 126
        %v369 = vpop.permute.xlu0 %368
        %vm370 = vcmask 1031168
        %v371 = vsel %vm370, %v365, %v367
        %v372 = vsel %vm370, %v367, %v369
        %v375 = vsel %vm359, %v371, 0.0
        %v376 = vsel %vm360, %v372, 0.0
        %v377 = vadd.f32 %v348, %v375
        %v378 = vadd.f32 %v349, %v376
        %379 = vset.pattern.permute.xlu0 3
        %380 = vperm.xlu0 %379, %v242
        %v381 = vpop.permute.xlu0 %380
        %v383 = vmul.f32 %v257, %v381
        %v384 = vmul.f32 %v253, %v381
        %v385 = vmul.f32 %v258, %v381
        %389 = vrot.lane.b32.xlu0 %v383, 112
        %v390 = vpop.permute.xlu0 %389
        %391 = vrot.lane.b32.xlu0 %v384, 112
        %v392 = vpop.permute.xlu0 %391
        %393 = vrot.lane.b32.xlu0 %v385, 112
        %v394 = vpop.permute.xlu0 %393
        %vm395 = vcmask 916480
        %v396 = vsel %vm395, %v390, %v392
        %v397 = vsel %vm395, %v392, %v394
        %v400 = vsel %vm321, %v396, 0.0
        %v401 = vsel %vm322, %v397, 0.0
        %v402 = vadd.f32 %v377, %v400
        %v403 = vadd.f32 %v378, %v401
        %404 = vset.pattern.permute.xlu0 5
        %405 = vperm.xlu0 %404, %v242
        %v406 = vpop.permute.xlu0 %405
        %v408 = vmul.f32 %v257, %v406
        %v409 = vmul.f32 %v253, %v406
        %v410 = vmul.f32 %v258, %v406
        %414 = vrot.lane.b32.xlu0 %v408, 110
        %v415 = vpop.permute.xlu0 %414
        %416 = vrot.lane.b32.xlu0 %v409, 110
        %v417 = vpop.permute.xlu0 %416
        %418 = vrot.lane.b32.xlu0 %v410, 110
        %v419 = vpop.permute.xlu0 %418
        %vm420 = vcmask 900096
        %v421 = vsel %vm420, %v415, %v417
        %v422 = vsel %vm420, %v417, %v419
        %v425 = vsel %vm359, %v421, 0.0
        %v426 = vsel %vm360, %v422, 0.0
        %v427 = vadd.f32 %v402, %v425
        %v428 = vadd.f32 %v403, %v426
        %429 = vset.pattern.permute.xlu0 6
        %430 = vperm.xlu0 %429, %v242
        %v431 = vpop.permute.xlu0 %430
        %v433 = vmul.f32 %v257, %v431
        %v434 = vmul.f32 %v253, %v431
        %v435 = vmul.f32 %v258, %v431
        %439 = vrot.lane.b32.xlu0 %v433, 96
        %v440 = vpop.permute.xlu0 %439
        %441 = vrot.lane.b32.xlu0 %v434, 96
        %v442 = vpop.permute.xlu0 %441
        %443 = vrot.lane.b32.xlu0 %v435, 96
        %v444 = vpop.permute.xlu0 %443
        %vm445 = vcmask 785408
        %v446 = vsel %vm445, %v440, %v442
        %v447 = vsel %vm445, %v442, %v444
        %v450 = vsel %vm321, %v446, 0.0
        %v451 = vsel %vm322, %v447, 0.0
        %v452 = vadd.f32 %v427, %v450
        %v453 = vadd.f32 %v428, %v451
        %454 = vset.pattern.permute.xlu0 7
        %455 = vperm.xlu0 %454, %v242
        %v456 = vpop.permute.xlu0 %455
        %v458 = vmul.f32 %v257, %v456
        %v459 = vmul.f32 %v253, %v456
        %v460 = vmul.f32 %v258, %v456
        %464 = vrot.lane.b32.xlu0 %v458, 95
        %v465 = vpop.permute.xlu0 %464
        %466 = vrot.lane.b32.xlu0 %v459, 95
        %v467 = vpop.permute.xlu0 %466
        %468 = vrot.lane.b32.xlu0 %v460, 95
        %v469 = vpop.permute.xlu0 %468
        %vm470 = vcmask 777216
        %v471 = vsel %vm470, %v465, %v467
        %v472 = vsel %vm470, %v467, %v469
        %v475 = vadd.f32 %v452, %v471
        %v476 = vadd.f32 %v453, %v472
        %477 = vset.pattern.permute.xlu0 8
        %478 = vperm.xlu0 %477, %v242
        %v479 = vpop.permute.xlu0 %478
        %v481 = vmul.f32 %v257, %v479
        %v482 = vmul.f32 %v253, %v479
        %v483 = vmul.f32 %v258, %v479
        %487 = vrot.lane.b32.xlu0 %v481, 94
        %v488 = vpop.permute.xlu0 %487
        %489 = vrot.lane.b32.xlu0 %v482, 94
        %v490 = vpop.permute.xlu0 %489
        %491 = vrot.lane.b32.xlu0 %v483, 94
        %v492 = vpop.permute.xlu0 %491
        %vm493 = vcmask 769024
        %v494 = vsel %vm493, %v488, %v490
        %v495 = vsel %vm493, %v490, %v492
        %v498 = vsel %vm359, %v494, 0.0
        %v499 = vsel %vm360, %v495, 0.0
        %v500 = vadd.f32 %v475, %v498
        %v501 = vadd.f32 %v476, %v499
        %v504 = vrot.slane %v501, 4
        %vm505 = vcmask 1043456
        %v506 = vsel %vm505, %v500, %v504
        %508 = vst [vmem:[%s232] sm:$0xff] %v506
        %s509 = sand.u32 %s122, 1
        %s510 = scalar_lea.sflag [#allocation4], %s509
        %s511 = sand.u32 %s122, 1
        %s512 = smul.addr %s511, 8
        %s513 = scalar_lea.vmem [#allocation5], %s512
        // Predicated region
        $region37: #{tpu_custom_call.1} parent=31 // pred_check
          %p514 = pneg %p132
        $region38: #{tpu_custom_call.1} parent=31 // pred_check_branch
          %516 = sbr.rel (%p514) target = $region40
        $region39: #{tpu_custom_call.1} parent=31 // pred_region
          %518 = vsyncadd %s510, 0
          %s519 = smul.addr %s25, 2
          %s520 = smul.addr %s24, 2
          %s521 = sadd.s32 %s519, %s520
          %s522 = smul.addr %s521, 4
          %s523 = scalar_lea.hbm %s3, %s522
          %s525 = sshll.u32 %s513, 4
          %s526 = int_to_ptr.vmem [resolvable:$true] %s525
          %s527 = sshll.u32 %s523, 4
          %s528 = int_to_ptr.hbm [resolvable:$true] %s527
          %530 = dma.vmem_to_hbm [thread:$0]  %s526, 128, %s528, %s510
        $region40: #{tpu_custom_call.1} parent=31 // pred_fallthru
          _
      $region32: #{tpu_custom_call.1} parent=5 // pred_fallthru
        _
      %p531 = scmp.le.s32.totalorder 2, %s15
      // Predicated region
      $region41: #{tpu_custom_call.1} parent=5 // pred_check
        %p532 = pneg %p531
      $region42: #{tpu_custom_call.1} parent=5 // pred_check_branch
        %534 = sbr.rel (%p532) target = $region44
      $region43: #{tpu_custom_call.1} parent=5 // pred_region
        %s535 = ssub.s32 %s15, 2
        // Predicated region
        $region45: #{tpu_custom_call.1} parent=43 // pred_check
          %p536 = pneg %p138
        $region46: #{tpu_custom_call.1} parent=43 // pred_check_branch
          %538 = sbr.rel (%p536) target = $region48
        $region47: #{tpu_custom_call.1} parent=43 // pred_region
          %s539 = sand.u32 %s123, 1
          %s540 = scalar_lea.sflag [#allocation4], %s539
          %s541 = sand.u32 %s123, 1
          %s542 = smul.addr %s541, 8
          %s543 = scalar_lea.vmem [#allocation5], %s542
          %545 = dma.done %s540, 128
        $region48: #{tpu_custom_call.1} parent=43 // pred_fallthru
          _
      $region44: #{tpu_custom_call.1} parent=5 // pred_fallthru
        _
    $region6: #{tpu_custom_call.1} parent=1 // loop_footer
      %s19 = sadd.s32 1, %s15
    $region7: #{tpu_custom_call.1} parent=1 // loop_footer_branch
      %14 = sbr.rel target = $region3
    $region8: #{tpu_custom_call.1} parent=1 // loop_exit
      _
    %546 = vsyncpa [#allocation3], 1
    %s547 = scalar_lea.sflag [#allocation3], 1
    %548 = vsyncpa %s547, 1
    %549 = vsyncpa [#allocation4], 1
    %s550 = scalar_lea.sflag [#allocation4], 1
    %551 = vsyncpa %s550, 1

</llo_original>
